<compile_context>
chip_gen: v7x
topology: tpu7x:2x2x1
jax: 0.10.0
libtpu: 0.0.40
codegen_flags: <defaults>
</compile_context>

<pallas_src>
import functools

import jax
import jax.numpy as jnp
from jax.experimental import pallas as pl
from jax.experimental.pallas import tpu as pltpu

HIDDEN = 256
OUT = 3
PAD_OUT = 8          # narrow padded width for layer-2 / output (>= OUT)
NEG_INF = -1e30      # padded-lane bias -> exp underflows to exactly 0


def _mlp_softmax_kernel(x_ref, w1_ref, b1_ref, w2_ref, b2_ref, o_ref):
    # Cast the f32 input tile to bf16 inside the kernel (free: mem-bound).
    x = x_ref[...].astype(jnp.bfloat16)

    # Dense1: Linear (bf16 x bf16 -> f32 acc) + bias + ReLU
    h = jnp.dot(x, w1_ref[...], preferred_element_type=jnp.float32)
    h = jnp.maximum(h + b1_ref[...], 0.0)

    # Dense2: Linear into the (TB, PAD_OUT) logits slab.
    logits = jnp.dot(h.astype(w2_ref.dtype), w2_ref[...],
                     preferred_element_type=jnp.float32)
    logits = logits + b2_ref[...]          # padded lanes become ~ -1e30

    # Numerically stable softmax over the last dim; padded lanes contribute 0.
    # Exact division so each real row sums to 1 (up to f32 rounding).
    m = jnp.max(logits, axis=-1, keepdims=True)
    e = jnp.exp(logits - m)
    denom = jnp.sum(e, axis=-1, keepdims=True)
    o_ref[...] = (e / denom).astype(o_ref.dtype)


def _cdiv(a, b):
    return -(-a // b)


def _round_up(x, m):
    return (x + m - 1) // m * m


@functools.partial(jax.jit, static_argnames=("block_b",))
def network_forward(x, w1, b1, w2, b2, *, block_b=2048):
    """x: (B, D); w1: (D, 256); b1: (1, 256); w2: (256, 3); b2: (1, 3).

    Returns (B, 3) f32 softmax probabilities (matches the PyTorch module).
    """
    B, D = x.shape
    x = x.astype(jnp.float32)

    # Small, one-off parameter prep (weights are tiny; cast in the wrapper).
    w1b = w1.astype(jnp.bfloat16)
    b1f = b1.reshape(1, HIDDEN).astype(jnp.float32)
    # Pad layer 2 to PAD_OUT lanes: zero weights, -inf bias in padded lanes.
    w2p = jnp.zeros((HIDDEN, PAD_OUT), jnp.bfloat16).at[:, :OUT].set(
        w2.astype(jnp.bfloat16))
    b2p = jnp.full((1, PAD_OUT), NEG_INF, jnp.float32).at[:, :OUT].set(
        b2.reshape(1, OUT).astype(jnp.float32))

    # Batch tiling:
    #  * rows padded to a multiple of 8 (f32 sublane)
    #  * at least 2 grid steps whenever the batch allows, so the "parallel"
    #    batch axis can actually shard across v7x's two TensorCores
    #  * tile capped at block_b rows (2048 rows -> ~0.25 MiB x tile +
    #    64 KiB out tile, double-buffered: trivial for every generation's VMEM)
    B8 = _round_up(B, 8)
    if B8 >= 16:
        tb = min(block_b, _round_up(_cdiv(B8, 2), 8))
    else:
        tb = B8
    Bp = _round_up(B8, tb)
    if Bp != B:
        x = jnp.pad(x, ((0, Bp - B), (0, 0)))
    grid = (Bp // tb,)

    flops = 2 * Bp * (D * HIDDEN + HIDDEN * PAD_OUT)
    bytes_accessed = (Bp * D * 4                    # x (f32, read once)
                      + D * HIDDEN * 2 + HIDDEN * 4  # w1 / b1
                      + HIDDEN * PAD_OUT * 2 + PAD_OUT * 4  # w2 / b2
                      + Bp * PAD_OUT * 4)            # narrow f32 output
    transcendentals = Bp * PAD_OUT

    out_padded = pl.pallas_call(
        _mlp_softmax_kernel,
        out_shape=jax.ShapeDtypeStruct((Bp, PAD_OUT), jnp.float32),
        grid=grid,
        in_specs=[
            pl.BlockSpec((tb, D), lambda i: (i, 0)),           # x tile
            pl.BlockSpec((D, HIDDEN), lambda i: (0, 0)),       # w1 (resident)
            pl.BlockSpec((1, HIDDEN), lambda i: (0, 0)),       # b1 (resident)
            pl.BlockSpec((HIDDEN, PAD_OUT), lambda i: (0, 0)),  # w2 (resident)
            pl.BlockSpec((1, PAD_OUT), lambda i: (0, 0)),      # b2 (resident)
        ],
        out_specs=pl.BlockSpec((tb, PAD_OUT), lambda i: (i, 0)),
        compiler_params=pltpu.CompilerParams(
            dimension_semantics=("parallel",)),
        cost_estimate=pl.CostEstimate(
            flops=flops,
            transcendentals=transcendentals,
            bytes_accessed=bytes_accessed),
    )(x, w1b, b1f, w2p, b2p)

    # Trivial (B, 8) -> (B, 3) slice (narrow output keeps this cheap).
    return out_padded[:B, :OUT]


def init_params(key, input_size, hidden=HIDDEN, output_size=OUT):
    """Deterministic init mimicking PyTorch nn.Linear default
    (uniform(-1/sqrt(fan_in), 1/sqrt(fan_in))); stored as (in, out)."""
    k1, k2, k3, k4 = jax.random.split(key, 4)
    lim1 = 1.0 / jnp.sqrt(jnp.float32(input_size))
    lim2 = 1.0 / jnp.sqrt(jnp.float32(hidden))
    w1 = jax.random.uniform(k1, (input_size, hidden), jnp.float32, -lim1, lim1)
    b1 = jax.random.uniform(k2, (1, hidden), jnp.float32, -lim1, lim1)
    w2 = jax.random.uniform(k3, (hidden, output_size), jnp.float32, -lim2, lim2)
    b2 = jax.random.uniform(k4, (1, output_size), jnp.float32, -lim2, lim2)
    return w1, b1, w2, b2


def reference_forward(x, w1, b1, w2, b2):
    """Pure-JAX reference with the same bf16-operand / f32-accumulate recipe."""
    h = jnp.dot(x.astype(jnp.bfloat16), w1.astype(jnp.bfloat16),
                preferred_element_type=jnp.float32)
    h = jnp.maximum(h + b1.reshape(1, -1), 0.0)
    logits = jnp.dot(h.astype(jnp.bfloat16), w2.astype(jnp.bfloat16),
                     preferred_element_type=jnp.float32) + b2.reshape(1, -1)
    return jax.nn.softmax(logits, axis=-1)


if __name__ == "__main__":
    key = jax.random.PRNGKey(0)
    kx, kp, kx2 = jax.random.split(key, 3)

    input_size = 32  # arbitrary PPO observation dim
    w1, b1, w2, b2 = init_params(kp, input_size)

    # Primary small test (tile-aligned batch, single grid step).
    batch = 8
    x = jax.random.normal(kx, (batch, input_size), jnp.float32)
    out = jax.block_until_ready(network_forward(x, w1, b1, w2, b2))
    ref = reference_forward(x, w1, b1, w2, b2)
    assert out.shape == (batch, OUT)
    assert jnp.allclose(out, ref, atol=2e-3, rtol=2e-3)
    assert jnp.allclose(jnp.sum(out, axis=-1), 1.0, atol=1e-3)

    # Secondary test: batch not a multiple of 8 exercises padding + slicing
    # and produces a 2-step grid (megacore path).
    batch2 = 13
    x2 = jax.random.normal(kx2, (batch2, input_size), jnp.float32)
    out2 = jax.block_until_ready(network_forward(x2, w1, b1, w2, b2))
    ref2 = reference_forward(x2, w1, b1, w2, b2)
    assert out2.shape == (batch2, OUT)
    assert jnp.allclose(out2, ref2, atol=2e-3, rtol=2e-3)
    assert jnp.allclose(jnp.sum(out2, axis=-1), 1.0, atol=1e-3)

    print("KERNEL_OK")
</pallas_src>

<mosaic_0001>
module attributes {stable_mosaic.version = 11 : i64} {
  func.func @_mlp_softmax_kernel(%arg0: i32, %arg1: memref<8x32xf32, #tpu.memory_space<vmem>>, %arg2: memref<32x256xbf16, #tpu.memory_space<vmem>>, %arg3: memref<1x256xf32, #tpu.memory_space<vmem>>, %arg4: memref<256x8xbf16, #tpu.memory_space<vmem>>, %arg5: memref<1x8xf32, #tpu.memory_space<vmem>>, %arg6: memref<8x8xf32, #tpu.memory_space<vmem>>) attributes {dimension_semantics = [#tpu.dimension_semantics<parallel>], iteration_bounds = array<i64: 1>, scalar_prefetch = 0 : i64, scratch_operands = 0 : i64, tpu.core_type = #tpu.core_type<tc>, window_params = [{transform_indices = @transform_0, window_bounds = array<i64: 8, 32>}, {pipeline_mode = #tpu.pipeline_mode<synchronous>, transform_indices = @transform_1, window_bounds = array<i64: 32, 256>}, {pipeline_mode = #tpu.pipeline_mode<synchronous>, transform_indices = @transform_2, window_bounds = array<i64: 1, 256>}, {pipeline_mode = #tpu.pipeline_mode<synchronous>, transform_indices = @transform_3, window_bounds = array<i64: 256, 8>}, {pipeline_mode = #tpu.pipeline_mode<synchronous>, transform_indices = @transform_4, window_bounds = array<i64: 1, 8>}, {transform_indices = @transform_5, window_bounds = array<i64: 8, 8>}]} {
    %c0 = arith.constant 0 : index
    %c0_0 = arith.constant 0 : index
    %0 = vector.load %arg1[%c0, %c0_0] : memref<8x32xf32, #tpu.memory_space<vmem>>, vector<8x32xf32>
    %1 = arith.truncf %0 : vector<8x32xf32> to vector<8x32xbf16>
    %c0_1 = arith.constant 0 : index
    %c0_2 = arith.constant 0 : index
    %2 = vector.load %arg2[%c0_1, %c0_2] : memref<32x256xbf16, #tpu.memory_space<vmem>>, vector<32x256xbf16>
    %cst = arith.constant dense<0.000000e+00> : vector<8x256xf32>
    %3 = tpu.matmul %1, %2, %cst {dimension_numbers = #tpu.dot_dimension_numbers<[1], [0], [0], [1], [0, 0, 1, 1], [], []>} : vector<8x32xbf16>, vector<32x256xbf16>, vector<8x256xf32> -> vector<8x256xf32>
    %c0_3 = arith.constant 0 : index
    %c0_4 = arith.constant 0 : index
    %4 = vector.load %arg3[%c0_3, %c0_4] : memref<1x256xf32, #tpu.memory_space<vmem>>, vector<1x256xf32>
    %5 = vector.broadcast %4 : vector<1x256xf32> to vector<8x256xf32>
    %6 = arith.addf %3, %5 : vector<8x256xf32>
    %cst_5 = arith.constant 0.000000e+00 : f32
    %7 = vector.broadcast %cst_5 : f32 to vector<8x256xf32>
    %8 = arith.maximumf %6, %7 : vector<8x256xf32>
    %9 = arith.truncf %8 : vector<8x256xf32> to vector<8x256xbf16>
    %c0_6 = arith.constant 0 : index
    %c0_7 = arith.constant 0 : index
    %10 = vector.load %arg4[%c0_6, %c0_7] : memref<256x8xbf16, #tpu.memory_space<vmem>>, vector<256x8xbf16>
    %cst_8 = arith.constant dense<0.000000e+00> : vector<8x8xf32>
    %11 = tpu.matmul %9, %10, %cst_8 {dimension_numbers = #tpu.dot_dimension_numbers<[1], [0], [0], [1], [0, 0, 1, 1], [], []>} : vector<8x256xbf16>, vector<256x8xbf16>, vector<8x8xf32> -> vector<8x8xf32>
    %c0_9 = arith.constant 0 : index
    %c0_10 = arith.constant 0 : index
    %12 = vector.load %arg5[%c0_9, %c0_10] : memref<1x8xf32, #tpu.memory_space<vmem>>, vector<1x8xf32>
    %13 = vector.broadcast %12 : vector<1x8xf32> to vector<8x8xf32>
    %14 = arith.addf %11, %13 : vector<8x8xf32>
    %cst_11 = arith.constant dense<0xFF800000> : vector<8xf32>
    %15 = vector.multi_reduction <maximumf>, %14, %cst_11 [1] : vector<8x8xf32> to vector<8xf32>
    %16 = vector.shape_cast %15 : vector<8xf32> to vector<8x1xf32>
    %17 = vector.broadcast %16 : vector<8x1xf32> to vector<8x8xf32>
    %18 = arith.subf %14, %17 : vector<8x8xf32>
    %19 = math.exp %18 : vector<8x8xf32>
    %cst_12 = arith.constant dense<0.000000e+00> : vector<8xf32>
    %20 = vector.multi_reduction <add>, %19, %cst_12 [1] : vector<8x8xf32> to vector<8xf32>
    %21 = vector.shape_cast %20 : vector<8xf32> to vector<8x1xf32>
    %22 = vector.broadcast %21 : vector<8x1xf32> to vector<8x8xf32>
    %23 = arith.divf %19, %22 : vector<8x8xf32>
    %c0_13 = arith.constant 0 : index
    %c0_14 = arith.constant 0 : index
    %24 = vector.load %arg6[%c0_13, %c0_14] : memref<8x8xf32, #tpu.memory_space<vmem>>, vector<8x8xf32>
    tpu.vector_store %arg6[%c0_13, %c0_14], %23 {strides = array<i32>} : memref<8x8xf32, #tpu.memory_space<vmem>>, vector<8x8xf32>,
    return
  }
  func.func @transform_0(%arg0: i32) -> (i32, i32) {
    %c0_i32 = arith.constant 0 : i32
    %c0_i32_0 = arith.constant 0 : i32
    return %arg0, %c0_i32 : i32, i32
  }
  func.func @transform_1(%arg0: i32) -> (i32, i32) {
    %c0_i32 = arith.constant 0 : i32
    %c0_i32_0 = arith.constant 0 : i32
    %c0_i32_1 = arith.constant 0 : i32
    return %c0_i32, %c0_i32_0 : i32, i32
  }
  func.func @transform_2(%arg0: i32) -> (i32, i32) {
    %c0_i32 = arith.constant 0 : i32
    %c0_i32_0 = arith.constant 0 : i32
    %c0_i32_1 = arith.constant 0 : i32
    return %c0_i32, %c0_i32_0 : i32, i32
  }
  func.func @transform_3(%arg0: i32) -> (i32, i32) {
    %c0_i32 = arith.constant 0 : i32
    %c0_i32_0 = arith.constant 0 : i32
    %c0_i32_1 = arith.constant 0 : i32
    return %c0_i32, %c0_i32_0 : i32, i32
  }
  func.func @transform_4(%arg0: i32) -> (i32, i32) {
    %c0_i32 = arith.constant 0 : i32
    %c0_i32_0 = arith.constant 0 : i32
    %c0_i32_1 = arith.constant 0 : i32
    return %c0_i32, %c0_i32_0 : i32, i32
  }
  func.func @transform_5(%arg0: i32) -> (i32, i32) {
    %c0_i32 = arith.constant 0 : i32
    %c0_i32_0 = arith.constant 0 : i32
    return %arg0, %c0_i32 : i32, i32
  }
}

</mosaic_0001>

<llo_original>
// kernel: network_forward.1
$region0: #{network_forward.1}
  #allocation0 [shape = 'u32[]', space=smem, size = 0x4, offset = 0x4, fixed_abs, tag = 'smem constant byte address 0x4 - core index']
  #allocation1 [shape = 'u32[144,128]{1,0:T(1,128)}', space=vmem, size = 0x12000, scoped, tag = 'internal scratch']
  %s0 = inlined_call_operand.vmem [shape: f32[8,32], index: 0, kind: input, shape index: {}]
  %s1 = inlined_call_operand.vmem [shape: bf16[32,256], index: 1, kind: input, shape index: {}]
  %s2 = inlined_call_operand.vmem [shape: f32[1,256], index: 2, kind: input, shape index: {}]
  %s3 = inlined_call_operand.vmem [shape: bf16[256,8], index: 3, kind: input, shape index: {}]
  %s4 = inlined_call_operand.vmem [shape: f32[1,8], index: 4, kind: input, shape index: {}]
  %s5 = inlined_call_operand.vmem [shape: f32[8,8], index: 5, kind: output, shape index: {}]
  %s6 = sld [smem:[#allocation0]]
  $region30: #{network_forward.1} parent=0
    _
  %s8 = ssub.s32 1, %s6
  %s9 = scalar_select 0, %s8, %s6
  // Predicated region
  $region2: #{network_forward.1} parent=0 // pred_check
    _
  $region3: #{network_forward.1} parent=0 // pred_check_branch
    %11 = sbr.rel (0) target = $region5
  $region4: #{network_forward.1} parent=0 // pred_region
    _
  $region5: #{network_forward.1} parent=0 // pred_fallthru
    _
  // Predicated region
  $region6: #{network_forward.1} parent=0 // pred_check
    _
  $region7: #{network_forward.1} parent=0 // pred_check_branch
    %13 = sbr.rel (0) target = $region9
  $region8: #{network_forward.1} parent=0 // pred_region
    _
  $region9: #{network_forward.1} parent=0 // pred_fallthru
    _
  // Predicated region
  $region10: #{network_forward.1} parent=0 // pred_check
    _
  $region11: #{network_forward.1} parent=0 // pred_check_branch
    %15 = sbr.rel (0) target = $region13
  $region12: #{network_forward.1} parent=0 // pred_region
    _
  $region13: #{network_forward.1} parent=0 // pred_fallthru
    _
  // Predicated region
  $region14: #{network_forward.1} parent=0 // pred_check
    _
  $region15: #{network_forward.1} parent=0 // pred_check_branch
    %17 = sbr.rel (0) target = $region17
  $region16: #{network_forward.1} parent=0 // pred_region
    _
  $region17: #{network_forward.1} parent=0 // pred_fallthru
    _
  // Predicated region
  $region18: #{network_forward.1} parent=0 // pred_check
    _
  $region19: #{network_forward.1} parent=0 // pred_check_branch
    %19 = sbr.rel (0) target = $region21
  $region20: #{network_forward.1} parent=0 // pred_region
    _
  $region21: #{network_forward.1} parent=0 // pred_fallthru
    _
  %v21 = vld [vmem:[%s0] sm:$0xff]
  %v22 = vpack.c.bf16 %v21, %v21
  %v23 = vld [vmem:[%s1] sm:$0xff]
  %v24 = vld [vmem:[%s1 + $0x8] sm:$0xff]
  %v25 = vld [vmem:[%s1 + $0x10] sm:$0xff]
  %v26 = vld [vmem:[%s1 + $0x18] sm:$0xff]
  %v27 = vld [vmem:[%s2] sm:$0x3]
  %v29 = vlaneseq
  %v30 = vshrl.u32 %v29, 7
  %v31 = vsub.s32 0, %v30
  %v32 = vrot.slane %v27, %v31
  %v33 = vlaneseq
  %v34 = vshrl.u32 %v33, 7
  %v35 = vsub.s32 1, %v34
  %v36 = vrot.slane %v27, %v35
  %v43 = vunpack.c.l.b16 %v23
  %v44 = vunpack.c.h.b16 %v23
  %v45 = vunpack.c.l.b16 %v24
  %v46 = vunpack.c.h.b16 %v24
  %v47 = vunpack.c.l.b16 %v25
  %v48 = vunpack.c.h.b16 %v25
  %v49 = vunpack.c.l.b16 %v26
  %v50 = vunpack.c.h.b16 %v26
  %v51 = vpack.c.b16 %v45, %v43
  %v52 = vpack.c.b16 %v46, %v44
  %v53 = vpack.c.b16 %v49, %v47
  %v54 = vpack.c.b16 %v50, %v48
  %vm59 = vcmask 261120
  %v61 = vsel %vm59, %v22, 0
  %63 = vmatprep.subr.bf16.mxu0 %v52
  %64 = vmatpush1.bf16.msra.mxu0 %v51
  %65 = vmatprep.subr.bf16.mxu0 %v54
  %66 = vmatpush1.bf16.msra.mxu0 %v53
  %67 = vmatprep.subr.bf16.mxu0 0
  %68 = vmatpush1.bf16.msra.mxu0 0
  %69 = vmatprep.subr.bf16.mxu0 0
  %70 = vmatpush1.bf16.msra.mxu0 0
  %71 = vmatprep.subr.bf16.mxu0 0
  %72 = vmatpush1.bf16.msra.mxu0 0
  %73 = vmatprep.subr.bf16.mxu0 0
  %74 = vmatpush1.bf16.msra.mxu0 0
  %75 = vmatprep.subr.bf16.mxu0 0
  %76 = vmatpush1.bf16.msra.mxu0 0
  %77 = vmatprep.subr.bf16.mxu0 0
  %78 = vmatpush1.bf16.msra.mxu0 0
  %79 = vmatprep.subr.bf16.mxu0 0
  %80 = vmatpush1.bf16.msra.mxu0 0
  %81 = vmatprep.subr.bf16.mxu0 0
  %82 = vmatpush1.bf16.msra.mxu0 0
  %83 = vmatprep.subr.bf16.mxu0 0
  %84 = vmatpush1.bf16.msra.mxu0 0
  %85 = vmatprep.subr.bf16.mxu0 0
  %86 = vmatpush1.bf16.msra.mxu0 0
  %87 = vmatprep.subr.bf16.mxu0 0
  %88 = vmatpush1.bf16.msra.mxu0 0
  %89 = vmatprep.subr.bf16.mxu0 0
  %90 = vmatpush1.bf16.msra.mxu0 0
  %91 = vmatprep.subr.bf16.mxu0 0
  %92 = vmatpush1.bf16.msra.mxu0 0
  %93 = vmatprep.subr.bf16.mxu0 0
  %94 = vmatpush1.bf16.msra.mxu0 0
  %95 = vmatprep.mubr.bf16.mxu0 0
  %96 = vmatmul.mubr.bf16.gmra.mrb[0].mxu0 %v61
  %v97 = vpop.f32.mrb[0].mxu0
  %v98 = vadd.f32 %v32, %v97
  %v99 = vpop.f32.mrb[0].mxu0
  %v100 = vadd.f32 %v36, %v99
  %v101 = vpop.f32.mrb[0].mxu0
  %v102 = vpop.f32.mrb[0].mxu0
  %103 = vdwg.mxu0
  %v104 = vmax.f32 %v98, 0.0
  %v105 = vmax.f32 %v100, 0.0
  %v106 = vpack.c.bf16 %v104, %v104
  %v107 = vpack.c.bf16 %v105, %v105
  %v108 = vld [vmem:[%s3] sm:$0xf]
  %v109 = vld [vmem:[%s3 + $0x4] sm:$0xf]
  %v110 = vld [vmem:[%s3 + $0x8] sm:$0xf]
  %v111 = vld [vmem:[%s3 + $0xc] sm:$0xf]
  %v112 = vld [vmem:[%s3 + $0x10] sm:$0xf]
  %v113 = vld [vmem:[%s3 + $0x14] sm:$0xf]
  %v114 = vld [vmem:[%s3 + $0x18] sm:$0xf]
  %v115 = vld [vmem:[%s3 + $0x1c] sm:$0xf]
  %v116 = vld [vmem:[%s3 + $0x20] sm:$0xf]
  %v117 = vld [vmem:[%s3 + $0x24] sm:$0xf]
  %v118 = vld [vmem:[%s3 + $0x28] sm:$0xf]
  %v119 = vld [vmem:[%s3 + $0x2c] sm:$0xf]
  %v120 = vld [vmem:[%s3 + $0x30] sm:$0xf]
  %v121 = vld [vmem:[%s3 + $0x34] sm:$0xf]
  %v122 = vld [vmem:[%s3 + $0x38] sm:$0xf]
  %v123 = vld [vmem:[%s3 + $0x3c] sm:$0xf]
  %v124 = vld [vmem:[%s3 + $0x40] sm:$0xf]
  %v125 = vld [vmem:[%s3 + $0x44] sm:$0xf]
  %v126 = vld [vmem:[%s3 + $0x48] sm:$0xf]
  %v127 = vld [vmem:[%s3 + $0x4c] sm:$0xf]
  %v128 = vld [vmem:[%s3 + $0x50] sm:$0xf]
  %v129 = vld [vmem:[%s3 + $0x54] sm:$0xf]
  %v130 = vld [vmem:[%s3 + $0x58] sm:$0xf]
  %v131 = vld [vmem:[%s3 + $0x5c] sm:$0xf]
  %v132 = vld [vmem:[%s3 + $0x60] sm:$0xf]
  %v133 = vld [vmem:[%s3 + $0x64] sm:$0xf]
  %v134 = vld [vmem:[%s3 + $0x68] sm:$0xf]
  %v135 = vld [vmem:[%s3 + $0x6c] sm:$0xf]
  %v136 = vld [vmem:[%s3 + $0x70] sm:$0xf]
  %v137 = vld [vmem:[%s3 + $0x74] sm:$0xf]
  %v138 = vld [vmem:[%s3 + $0x78] sm:$0xf]
  %v139 = vld [vmem:[%s3 + $0x7c] sm:$0xf]
  %v140 = vld [vmem:[%s4] sm:$0x1]
  %v142 = vlaneseq
  %v143 = vshrl.u32 %v142, 7
  %v144 = vsub.s32 0, %v143
  %v145 = vrot.slane %v140, %v144
  %v179 = vunpack.c.l.b16 %v108
  %v180 = vunpack.c.l.b16 %v109
  %v181 = vunpack.c.l.b16 %v110
  %v182 = vunpack.c.l.b16 %v111
  %v183 = vunpack.c.l.b16 %v112
  %v184 = vunpack.c.l.b16 %v113
  %v185 = vunpack.c.l.b16 %v114
  %v186 = vunpack.c.l.b16 %v115
  %v187 = vunpack.c.l.b16 %v116
  %v188 = vunpack.c.l.b16 %v117
  %v189 = vunpack.c.l.b16 %v118
  %v190 = vunpack.c.l.b16 %v119
  %v191 = vunpack.c.l.b16 %v120
  %v192 = vunpack.c.l.b16 %v121
  %v193 = vunpack.c.l.b16 %v122
  %v194 = vunpack.c.l.b16 %v123
  %v195 = vunpack.c.l.b16 %v124
  %v196 = vunpack.c.l.b16 %v125
  %v197 = vunpack.c.l.b16 %v126
  %v198 = vunpack.c.l.b16 %v127
  %v199 = vunpack.c.l.b16 %v128
  %v200 = vunpack.c.l.b16 %v129
  %v201 = vunpack.c.l.b16 %v130
  %v202 = vunpack.c.l.b16 %v131
  %v203 = vunpack.c.l.b16 %v132
  %v204 = vunpack.c.l.b16 %v133
  %v205 = vunpack.c.l.b16 %v134
  %v206 = vunpack.c.l.b16 %v135
  %v207 = vunpack.c.l.b16 %v136
  %v208 = vunpack.c.l.b16 %v137
  %v209 = vunpack.c.l.b16 %v138
  %v210 = vunpack.c.l.b16 %v139
  %v211 = vpack.c.b16 %v180, %v179
  %v212 = vpack.c.b16 %v182, %v181
  %v213 = vpack.c.b16 %v184, %v183
  %v214 = vpack.c.b16 %v186, %v185
  %v215 = vpack.c.b16 %v188, %v187
  %v216 = vpack.c.b16 %v190, %v189
  %v217 = vpack.c.b16 %v192, %v191
  %v218 = vpack.c.b16 %v194, %v193
  %v219 = vpack.c.b16 %v196, %v195
  %v220 = vpack.c.b16 %v198, %v197
  %v221 = vpack.c.b16 %v200, %v199
  %v222 = vpack.c.b16 %v202, %v201
  %v223 = vpack.c.b16 %v204, %v203
  %v224 = vpack.c.b16 %v206, %v205
  %v225 = vpack.c.b16 %v208, %v207
  %v226 = vpack.c.b16 %v210, %v209
  %243 = vmatprep.subr.bf16.mxu0 0
  %244 = vmatpush1.bf16.msra.mxu0 %v211
  %245 = vmatprep.subr.bf16.mxu0 0
  %246 = vmatpush1.bf16.msra.mxu0 %v212
  %247 = vmatprep.subr.bf16.mxu0 0
  %248 = vmatpush1.bf16.msra.mxu0 %v213
  %249 = vmatprep.subr.bf16.mxu0 0
  %250 = vmatpush1.bf16.msra.mxu0 %v214
  %251 = vmatprep.subr.bf16.mxu0 0
  %252 = vmatpush1.bf16.msra.mxu0 %v215
  %253 = vmatprep.subr.bf16.mxu0 0
  %254 = vmatpush1.bf16.msra.mxu0 %v216
  %255 = vmatprep.subr.bf16.mxu0 0
  %256 = vmatpush1.bf16.msra.mxu0 %v217
  %257 = vmatprep.subr.bf16.mxu0 0
  %258 = vmatpush1.bf16.msra.mxu0 %v218
  %259 = vmatprep.subr.bf16.mxu0 0
  %260 = vmatpush1.bf16.msra.mxu0 %v219
  %261 = vmatprep.subr.bf16.mxu0 0
  %262 = vmatpush1.bf16.msra.mxu0 %v220
  %263 = vmatprep.subr.bf16.mxu0 0
  %264 = vmatpush1.bf16.msra.mxu0 %v221
  %265 = vmatprep.subr.bf16.mxu0 0
  %266 = vmatpush1.bf16.msra.mxu0 %v222
  %267 = vmatprep.subr.bf16.mxu0 0
  %268 = vmatpush1.bf16.msra.mxu0 %v223
  %269 = vmatprep.subr.bf16.mxu0 0
  %270 = vmatpush1.bf16.msra.mxu0 %v224
  %271 = vmatprep.subr.bf16.mxu0 0
  %272 = vmatpush1.bf16.msra.mxu0 %v225
  %273 = vmatprep.subr.bf16.mxu0 0
  %274 = vmatpush1.bf16.msra.mxu0 %v226
  %275 = vmatprep.mubr.bf16.mxu0 %v107
  %276 = vmatmul.mubr.bf16.gmra.mrb[0].mxu0 %v106
  %v277 = vpop.f32.mrb[0].mxu0
  %v278 = vadd.f32 %v145, %v277
  %v279 = vpop.f32.mrb[0].mxu0
  %v280 = vpop.f32.mrb[0].mxu0
  %v281 = vpop.f32.mrb[0].mxu0
  %282 = vdwg.mxu0
  %vm283 = vcmask 64512
  %v284 = vsel %vm283, %v278, -inf
  %285 = vmax.xlane.f32.xlu0 %v284
  %v286 = vpop.xlane.xlu0 %285
  %v287 = vsub.f32 %v278, %v286
  %v288 = vmul.f32 %v287, 1.442695
  %v289 = vpow.pop %v288
  %v290 = vsel %vm283, %v289, 0.0
  %291 = vadd.xlane.f32.xlu0 %v290
  %v292 = vpop.xlane.xlu0 %291
  %v293 = vrcp.pop %v292
  %v294 = vmul.f32 %v289, %v293
  %295 = vst.msk [vmem:[%s5] sm:$0xff] %vm283, %v294
  // Predicated region
  $region22: #{network_forward.1} parent=0 // pred_check
    _
  $region23: #{network_forward.1} parent=0 // pred_check_branch
    %297 = sbr.rel (0) target = $region25
  $region24: #{network_forward.1} parent=0 // pred_region
    _
  $region25: #{network_forward.1} parent=0 // pred_fallthru
    _
  // Predicated region
  $region26: #{network_forward.1} parent=0 // pred_check
    _
  $region27: #{network_forward.1} parent=0 // pred_check_branch
    %299 = sbr.rel (0) target = $region29
  $region28: #{network_forward.1} parent=0 // pred_region
    _
  $region29: #{network_forward.1} parent=0 // pred_fallthru
    _

</llo_original>
